<compile_context>
chip_gen: v5e
topology: v5e:2x2
jax: 0.10.0
libtpu: 0.0.40
codegen_flags: <defaults>
</compile_context>

<pallas_src>
import functools

import jax
import jax.numpy as jnp
from jax import lax
from jax.experimental import pallas as pl
from jax.experimental.pallas import tpu as pltpu


def _round_up(x, m):
    return (x + m - 1) // m * m


# ----------------------------------------------------------------------------
# Kernel: DirectedEvolutionModel.forward with the top_model folded into the table.
#   per grid step (TB batch rows, all lane-dense):
#     counts[Vp, TB]  token histogram (compare sublane-iota vs one id row per token)
#     fit[1, TB]      = sum_v counts[v, :] * ew[v] * (1/S) + bias
# ----------------------------------------------------------------------------
def de_forward_kernel(ids_ref, ew_ref, b_ref, o_ref, *, inv_s):
    Sp, TB = ids_ref.shape          # ids tile: [padded seq, batch-lane]
    Vp = ew_ref.shape[0]            # sublane-padded vocab
    n_chunks = Sp // 8              # Sp is padded to a multiple of 8 in the wrapper

    # vocab id per sublane row, replicated across the 128 batch lanes
    sub_iota = lax.broadcasted_iota(jnp.int32, (Vp, TB), 0)

    def chunk_body(c, counts):
        start = pl.multiple_of(c * 8, 8)
        blk = ids_ref[pl.ds(start, 8), :]                    # [8, TB], one aligned vreg
        for r in range(8):                                   # bounded static unroll
            row = blk[r:r + 1, :]                            # [1, TB] lane-dense id row
            counts = counts + (sub_iota == row).astype(jnp.float32)
        return counts

    counts = lax.fori_loop(0, n_chunks, chunk_body,
                           jnp.zeros((Vp, TB), jnp.float32))  # [Vp, TB]

    # fitness = (1/S) * sum_v counts[v] * ew[v] + b   (VPU multiply + sublane reduce)
    fit = jnp.sum(counts * ew_ref[...], axis=0, keepdims=True)   # [1, TB]
    fit = fit * jnp.float32(inv_s) + b_ref[0]                    # bias scalar from SMEM
    o_ref[...] = fit                                             # unmasked lane-dense store


def prepare_de_params(embed_table, w_head, b_head):
    """Hoisted, once-per-model parameter prep: fold top_model into the embedding table."""
    V, D = embed_table.shape
    # >= 1 guaranteed-zero pad row so sequence padding can point at a zero-ew bin.
    Vp = _round_up(V + 1, 8)
    ew = embed_table.astype(jnp.float32) @ w_head.astype(jnp.float32).reshape(D, 1)  # [V,1]
    ew_p = jnp.zeros((Vp, 1), jnp.float32).at[:V, :].set(ew)
    b_s = b_head.astype(jnp.float32).reshape(1)
    return {"ew": ew_p, "b": b_s}


@functools.partial(jax.jit, static_argnames=("tb",))
def directed_evolution_forward(seq_ids, ew_p, b_s, *, tb=128):
    B, S = seq_ids.shape
    Vp = ew_p.shape[0]
    pad_id = Vp - 1                          # hits a zero row of ew -> contributes nothing

    Sp = _round_up(S, 8)                     # sublane-pad the sequence axis
    Bp = _round_up(B, tb)                    # lane-pad the batch axis to the tile size
    num_tiles = Bp // tb
    # NOTE(v7x): with B <= tb there is a single grid tile and the 2nd TensorCore idles;
    # real scoring batches (evolve() candidate sets) give >= 2 "parallel" tiles.

    ids_t = seq_ids.astype(jnp.int32).T                                  # [S, B]
    ids_p = jnp.pad(ids_t, ((0, Sp - S), (0, Bp - B)), constant_values=pad_id)

    out = pl.pallas_call(
        functools.partial(de_forward_kernel, inv_s=1.0 / S),
        out_shape=jax.ShapeDtypeStruct((1, Bp), jnp.float32),
        grid=(num_tiles,),
        in_specs=[
            pl.BlockSpec((Sp, tb), lambda b: (0, b)),            # ids, batch lane-dense
            pl.BlockSpec((Vp, 1), lambda b: (0, 0)),             # folded head column
            pl.BlockSpec(memory_space=pltpu.MemorySpace.SMEM),   # bias scalar
        ],
        out_specs=pl.BlockSpec((1, tb), lambda b: (0, b)),       # lane-dense fitness slab
        compiler_params=pltpu.CompilerParams(
            dimension_semantics=("parallel",),                   # batch tiles -> megacore
        ),
    )(ids_p, ew_p, b_s)

    return out.reshape(Bp)[:B].reshape(B, 1)


# ----------------------------------------------------------------------------
# AminoAcidWeightModel.forward: softmax(aa_weights / t, -1) @ embeddings
# Per perf review this stays plain jnp: at [3, 20] x [20, D] a pallas_call launch and the
# padding copies cost far more than the math; XLA handles the shape trivially.
# ----------------------------------------------------------------------------
def aa_weight_forward(aa_weights, embeddings, t=1.0):
    return jax.nn.softmax(aa_weights / t, axis=-1) @ embeddings


# ----------------------------------------------------------------------------
# Pure-JAX references for validation
# ----------------------------------------------------------------------------
def de_forward_ref(seq_ids, embed_table, w_head, b_head):
    emb = embed_table[seq_ids]                 # [B, S, D]
    vec = jnp.mean(emb, axis=1)                # [B, D]
    return vec @ w_head + b_head               # [B, 1]


if __name__ == "__main__":
    key = jax.random.PRNGKey(0)
    k_emb, k_w, k_b, k_ids, k_ids2 = jax.random.split(key, 5)

    # Small, module-consistent shapes
    B, S = 2, 8        # batch of tokenized sequences
    V, D = 33, 32      # ESM-like vocab size, hidden dim
    GAP = 4            # amino-acid tokens live in [GAP, GAP + 20)
    n_loc = 3          # number of mutated positions for AminoAcidWeightModel

    # Deterministic synthetic parameters (stand-ins for esm1b embed_tokens / top_model Linear)
    embed_table = jax.random.normal(k_emb, (V, D), dtype=jnp.float32) * 0.02
    w_head = jax.random.normal(k_w, (D, 1), dtype=jnp.float32) * 0.1
    b_head = jax.random.normal(k_b, (1, 1), dtype=jnp.float32) * 0.1

    # Deterministic "tokenized" inputs: amino-acid ids in [4, 24)
    seq_ids = jax.random.randint(k_ids, (B, S), GAP, GAP + 20, dtype=jnp.int32)

    # --- DirectedEvolutionModel.forward (single tile) ---
    params = prepare_de_params(embed_table, w_head, b_head)   # hoisted, once per model
    fitness = directed_evolution_forward(seq_ids, params["ew"], params["b"])
    jax.block_until_ready(fitness)
    assert fitness.shape == (B, 1)

    fitness_ref = de_forward_ref(seq_ids, embed_table, w_head, b_head)
    assert jnp.allclose(fitness, fitness_ref, atol=1e-5, rtol=1e-4), (
        jnp.max(jnp.abs(fitness - fitness_ref)))

    # --- multi-tile path (exercises batch padding + the "parallel" grid axis) ---
    B2 = 260
    seq_ids2 = jax.random.randint(k_ids2, (B2, S), GAP, GAP + 20, dtype=jnp.int32)
    fitness2 = directed_evolution_forward(seq_ids2, params["ew"], params["b"])
    jax.block_until_ready(fitness2)
    fitness2_ref = de_forward_ref(seq_ids2, embed_table, w_head, b_head)
    assert fitness2.shape == (B2, 1)
    assert jnp.allclose(fitness2, fitness2_ref, atol=1e-5, rtol=1e-4), (
        jnp.max(jnp.abs(fitness2 - fitness2_ref)))

    # --- AminoAcidWeightModel.forward (dependent class, plain jnp per perf review) ---
    # aa_weights built exactly as in __init__: zeros [len(loc), 20], 10 at the wild-type aa
    loc = [1, 3, 5]
    aa_weights = jnp.zeros((n_loc, 20), dtype=jnp.float32)
    for i, l in enumerate(loc):
        aa_weights = aa_weights.at[i, int(seq_ids[0, l]) - GAP].set(10.0)
    # embeddings = embed_tokens(range(20) + gap): rows [GAP, GAP+20) of the embedding table
    aa_embeddings = embed_table[GAP:GAP + 20, :]                          # [20, D]

    loc_emb = aa_weight_forward(aa_weights, aa_embeddings, t=1.0)
    jax.block_until_ready(loc_emb)
    p_manual = jnp.exp(aa_weights - jnp.max(aa_weights, -1, keepdims=True))
    p_manual = p_manual / jnp.sum(p_manual, -1, keepdims=True)
    assert loc_emb.shape == (n_loc, D)
    assert jnp.allclose(loc_emb, p_manual @ aa_embeddings, atol=1e-5, rtol=1e-4)

    # TODO(synk): evolve() (Adam training loop over aa_weights + combinatorial candidate
    # scoring with a real pretrained ESM-1b) has no clean single-kernel Pallas equivalent.

    print("KERNEL_OK")
</pallas_src>

<mosaic_0001>
module attributes {stable_mosaic.version = 11 : i64} {
  func.func @de_forward_kernel(%arg0: i32, %arg1: memref<8x128xi32, #tpu.memory_space<vmem>>, %arg2: memref<40x1xf32, #tpu.memory_space<vmem>>, %arg3: memref<1xf32, #tpu.memory_space<smem>>, %arg4: memref<1x128xf32, #tpu.memory_space<vmem>>) attributes {dimension_semantics = [#tpu.dimension_semantics<parallel>], iteration_bounds = array<i64: 1>, scalar_prefetch = 0 : i64, scratch_operands = 0 : i64, tpu.core_type = #tpu.core_type<tc>, window_params = [{transform_indices = @transform_0, window_bounds = array<i64: 8, 128>}, {pipeline_mode = #tpu.pipeline_mode<synchronous>, transform_indices = @transform_1, window_bounds = array<i64: 40, 1>}, {transform_indices = @transform_2, window_bounds = array<i64: 1>}, {transform_indices = @transform_3, window_bounds = array<i64: 1, 128>}]} {
    %0 = tpu.iota {dimensions = array<i32: 0>} : vector<40x128xi32>
    %cst = arith.constant 0.000000e+00 : f32
    %1 = vector.broadcast %cst : f32 to vector<40x128xf32>
    %c0_i32 = arith.constant 0 : i32
    %c8_i32 = arith.constant 8 : i32
    %2 = arith.muli %c0_i32, %c8_i32 : i32
    %3 = tpu.assume_multiple %2, 8 : i32
    %4 = arith.index_cast %3 : i32 to index
    %c0 = arith.constant 0 : index
    %5 = vector.load %arg1[%4, %c0] : memref<8x128xi32, #tpu.memory_space<vmem>>, vector<8x128xi32>
    %6 = vector.extract_strided_slice %5 {offsets = [0, 0], sizes = [1, 128], strides = [1, 1]} : vector<8x128xi32> to vector<1x128xi32>
    %7 = vector.broadcast %6 : vector<1x128xi32> to vector<40x128xi32>
    %8 = arith.cmpi eq, %0, %7 : vector<40x128xi32>
    %9 = arith.extui %8 : vector<40x128xi1> to vector<40x128xi32>
    %10 = arith.sitofp %9 : vector<40x128xi32> to vector<40x128xf32>
    %11 = arith.addf %1, %10 : vector<40x128xf32>
    %12 = vector.extract_strided_slice %5 {offsets = [1, 0], sizes = [1, 128], strides = [1, 1]} : vector<8x128xi32> to vector<1x128xi32>
    %13 = vector.broadcast %12 : vector<1x128xi32> to vector<40x128xi32>
    %14 = arith.cmpi eq, %0, %13 : vector<40x128xi32>
    %15 = arith.extui %14 : vector<40x128xi1> to vector<40x128xi32>
    %16 = arith.sitofp %15 : vector<40x128xi32> to vector<40x128xf32>
    %17 = arith.addf %11, %16 : vector<40x128xf32>
    %18 = vector.extract_strided_slice %5 {offsets = [2, 0], sizes = [1, 128], strides = [1, 1]} : vector<8x128xi32> to vector<1x128xi32>
    %19 = vector.broadcast %18 : vector<1x128xi32> to vector<40x128xi32>
    %20 = arith.cmpi eq, %0, %19 : vector<40x128xi32>
    %21 = arith.extui %20 : vector<40x128xi1> to vector<40x128xi32>
    %22 = arith.sitofp %21 : vector<40x128xi32> to vector<40x128xf32>
    %23 = arith.addf %17, %22 : vector<40x128xf32>
    %24 = vector.extract_strided_slice %5 {offsets = [3, 0], sizes = [1, 128], strides = [1, 1]} : vector<8x128xi32> to vector<1x128xi32>
    %25 = vector.broadcast %24 : vector<1x128xi32> to vector<40x128xi32>
    %26 = arith.cmpi eq, %0, %25 : vector<40x128xi32>
    %27 = arith.extui %26 : vector<40x128xi1> to vector<40x128xi32>
    %28 = arith.sitofp %27 : vector<40x128xi32> to vector<40x128xf32>
    %29 = arith.addf %23, %28 : vector<40x128xf32>
    %30 = vector.extract_strided_slice %5 {offsets = [4, 0], sizes = [1, 128], strides = [1, 1]} : vector<8x128xi32> to vector<1x128xi32>
    %31 = vector.broadcast %30 : vector<1x128xi32> to vector<40x128xi32>
    %32 = arith.cmpi eq, %0, %31 : vector<40x128xi32>
    %33 = arith.extui %32 : vector<40x128xi1> to vector<40x128xi32>
    %34 = arith.sitofp %33 : vector<40x128xi32> to vector<40x128xf32>
    %35 = arith.addf %29, %34 : vector<40x128xf32>
    %36 = vector.extract_strided_slice %5 {offsets = [5, 0], sizes = [1, 128], strides = [1, 1]} : vector<8x128xi32> to vector<1x128xi32>
    %37 = vector.broadcast %36 : vector<1x128xi32> to vector<40x128xi32>
    %38 = arith.cmpi eq, %0, %37 : vector<40x128xi32>
    %39 = arith.extui %38 : vector<40x128xi1> to vector<40x128xi32>
    %40 = arith.sitofp %39 : vector<40x128xi32> to vector<40x128xf32>
    %41 = arith.addf %35, %40 : vector<40x128xf32>
    %42 = vector.extract_strided_slice %5 {offsets = [6, 0], sizes = [1, 128], strides = [1, 1]} : vector<8x128xi32> to vector<1x128xi32>
    %43 = vector.broadcast %42 : vector<1x128xi32> to vector<40x128xi32>
    %44 = arith.cmpi eq, %0, %43 : vector<40x128xi32>
    %45 = arith.extui %44 : vector<40x128xi1> to vector<40x128xi32>
    %46 = arith.sitofp %45 : vector<40x128xi32> to vector<40x128xf32>
    %47 = arith.addf %41, %46 : vector<40x128xf32>
    %48 = vector.extract_strided_slice %5 {offsets = [7, 0], sizes = [1, 128], strides = [1, 1]} : vector<8x128xi32> to vector<1x128xi32>
    %49 = vector.broadcast %48 : vector<1x128xi32> to vector<40x128xi32>
    %50 = arith.cmpi eq, %0, %49 : vector<40x128xi32>
    %51 = arith.extui %50 : vector<40x128xi1> to vector<40x128xi32>
    %52 = arith.sitofp %51 : vector<40x128xi32> to vector<40x128xf32>
    %53 = arith.addf %47, %52 : vector<40x128xf32>
    %c1_i32 = arith.constant 1 : i32
    %c0_0 = arith.constant 0 : index
    %c0_1 = arith.constant 0 : index
    %54 = vector.load %arg2[%c0_0, %c0_1] : memref<40x1xf32, #tpu.memory_space<vmem>>, vector<40x1xf32>
    %55 = vector.broadcast %54 : vector<40x1xf32> to vector<40x128xf32>
    %56 = arith.mulf %53, %55 : vector<40x128xf32>
    %cst_2 = arith.constant dense<0.000000e+00> : vector<128xf32>
    %57 = vector.multi_reduction <add>, %56, %cst_2 [0] : vector<40x128xf32> to vector<128xf32>
    %58 = vector.shape_cast %57 : vector<128xf32> to vector<1x128xf32>
    %cst_3 = arith.constant 1.250000e-01 : f32
    %59 = vector.broadcast %cst_3 : f32 to vector<1x128xf32>
    %60 = arith.mulf %58, %59 : vector<1x128xf32>
    %c0_4 = arith.constant 0 : index
    %61 = memref.load %arg3[%c0_4] : memref<1xf32, #tpu.memory_space<smem>>
    %62 = vector.broadcast %61 : f32 to vector<1x128xf32>
    %63 = arith.addf %60, %62 : vector<1x128xf32>
    %c0_5 = arith.constant 0 : index
    %c0_6 = arith.constant 0 : index
    %64 = vector.load %arg4[%c0_5, %c0_6] : memref<1x128xf32, #tpu.memory_space<vmem>>, vector<1x128xf32>
    tpu.vector_store %arg4[%c0_5, %c0_6], %63 {strides = array<i32>} : memref<1x128xf32, #tpu.memory_space<vmem>>, vector<1x128xf32>,
    return
  }
  func.func @transform_0(%arg0: i32) -> (i32, i32) {
    %c0_i32 = arith.constant 0 : i32
    %c0_i32_0 = arith.constant 0 : i32
    return %c0_i32, %arg0 : i32, i32
  }
  func.func @transform_1(%arg0: i32) -> (i32, i32) {
    %c0_i32 = arith.constant 0 : i32
    %c0_i32_0 = arith.constant 0 : i32
    %c0_i32_1 = arith.constant 0 : i32
    return %c0_i32, %c0_i32_0 : i32, i32
  }
  func.func @transform_2(%arg0: i32) -> i32 {
    %c0_i32 = arith.constant 0 : i32
    %c0_i32_0 = arith.constant 0 : i32
    return %c0_i32 : i32
  }
  func.func @transform_3(%arg0: i32) -> (i32, i32) {
    %c0_i32 = arith.constant 0 : i32
    %c0_i32_0 = arith.constant 0 : i32
    return %c0_i32, %arg0 : i32, i32
  }
}

</mosaic_0001>

<llo_original>
// kernel: directed_evolution_forward.1
$region0: #{directed_evolution_forward.1}
  #allocation0 [shape = 'u32[]', space=smem, size = 0x4, offset = 0x4, fixed_abs, tag = 'smem constant byte address 0x4 - core index']
  #allocation1 [shape = 'u32[72,128]{1,0:T(1,128)}', space=vmem, size = 0x9000, scoped, tag = 'internal scratch']
  #allocation2 [shape = 'f32[1]{0:T(128)S(6)}', space=smem, size = 0x200, scoped, tag = 'scoped memory for directed_evolution_forward.1']
  %s0 = inlined_call_operand.vmem [shape: s32[8,128], index: 0, kind: input, shape index: {}]
  %s1 = inlined_call_operand.vmem [shape: f32[40,1], index: 1, kind: input, shape index: {}]
  %s2 = inlined_call_operand.<no memory space> [shape: f32[1], index: 2, kind: input, shape index: {}]
  %s3 = inlined_call_operand.vmem [shape: f32[1,128], index: 3, kind: output, shape index: {}]
  %s4 = sld [smem:[#allocation0]]
  $region22: #{directed_evolution_forward.1} parent=0
    _
  %s6 = ssub.s32 1, %s4
  %s7 = scalar_select 0, %s6, %s4
  %8 = sst [smem:[#allocation2]] %s2
  // Predicated region
  $region2: #{directed_evolution_forward.1} parent=0 // pred_check
    _
  $region3: #{directed_evolution_forward.1} parent=0 // pred_check_branch
    %10 = sbr.rel (0) target = $region5
  $region4: #{directed_evolution_forward.1} parent=0 // pred_region
    _
  $region5: #{directed_evolution_forward.1} parent=0 // pred_fallthru
    _
  // Predicated region
  $region6: #{directed_evolution_forward.1} parent=0 // pred_check
    _
  $region7: #{directed_evolution_forward.1} parent=0 // pred_check_branch
    %12 = sbr.rel (0) target = $region9
  $region8: #{directed_evolution_forward.1} parent=0 // pred_region
    _
  $region9: #{directed_evolution_forward.1} parent=0 // pred_fallthru
    _
  // Predicated region
  $region10: #{directed_evolution_forward.1} parent=0 // pred_check
    _
  $region11: #{directed_evolution_forward.1} parent=0 // pred_check_branch
    %14 = sbr.rel (0) target = $region13
  $region12: #{directed_evolution_forward.1} parent=0 // pred_region
    _
  $region13: #{directed_evolution_forward.1} parent=0 // pred_fallthru
    _
  %v15 = vlaneseq
  %v16 = vshrl.u32 %v15, 7
  %v17 = vadd.s32 %v16, 8
  %v18 = vadd.s32 %v16, 16
  %v19 = vadd.s32 %v16, 24
  %v20 = vadd.s32 %v16, 32
  %v21 = vld [vmem:[%s0] sm:$0xff]
  %v22 = vperm.slane %v21, 0
  %vm23 = vcmp.eq.s32.totalorder %v16, %v22
  %vm24 = vcmp.eq.s32.totalorder %v17, %v22
  %vm25 = vcmp.eq.s32.totalorder %v18, %v22
  %vm26 = vcmp.eq.s32.totalorder %v19, %v22
  %vm27 = vcmp.eq.s32.totalorder %v20, %v22
  %v28 = vsel %vm23, 1, 0
  %v29 = vsel %vm24, 1, 0
  %v30 = vsel %vm25, 1, 0
  %v31 = vsel %vm26, 1, 0
  %v32 = vsel %vm27, 1, 0
  %v33 = vcvt.s32.f32 %v28
  %v34 = vcvt.s32.f32 %v29
  %v35 = vcvt.s32.f32 %v30
  %v36 = vcvt.s32.f32 %v31
  %v37 = vcvt.s32.f32 %v32
  %v38 = vadd.f32 %v33, 0.0
  %v39 = vadd.f32 %v34, 0.0
  %v40 = vadd.f32 %v35, 0.0
  %v41 = vadd.f32 %v36, 0.0
  %v42 = vadd.f32 %v37, 0.0
  %v43 = vperm.slane %v21, 1
  %vm44 = vcmp.eq.s32.totalorder %v16, %v43
  %vm45 = vcmp.eq.s32.totalorder %v17, %v43
  %vm46 = vcmp.eq.s32.totalorder %v18, %v43
  %vm47 = vcmp.eq.s32.totalorder %v19, %v43
  %vm48 = vcmp.eq.s32.totalorder %v20, %v43
  %v49 = vsel %vm44, 1, 0
  %v50 = vsel %vm45, 1, 0
  %v51 = vsel %vm46, 1, 0
  %v52 = vsel %vm47, 1, 0
  %v53 = vsel %vm48, 1, 0
  %v54 = vcvt.s32.f32 %v49
  %v55 = vcvt.s32.f32 %v50
  %v56 = vcvt.s32.f32 %v51
  %v57 = vcvt.s32.f32 %v52
  %v58 = vcvt.s32.f32 %v53
  %v59 = vadd.f32 %v38, %v54
  %v60 = vadd.f32 %v39, %v55
  %v61 = vadd.f32 %v40, %v56
  %v62 = vadd.f32 %v41, %v57
  %v63 = vadd.f32 %v42, %v58
  %v64 = vperm.slane %v21, 2
  %vm65 = vcmp.eq.s32.totalorder %v16, %v64
  %vm66 = vcmp.eq.s32.totalorder %v17, %v64
  %vm67 = vcmp.eq.s32.totalorder %v18, %v64
  %vm68 = vcmp.eq.s32.totalorder %v19, %v64
  %vm69 = vcmp.eq.s32.totalorder %v20, %v64
  %v70 = vsel %vm65, 1, 0
  %v71 = vsel %vm66, 1, 0
  %v72 = vsel %vm67, 1, 0
  %v73 = vsel %vm68, 1, 0
  %v74 = vsel %vm69, 1, 0
  %v75 = vcvt.s32.f32 %v70
  %v76 = vcvt.s32.f32 %v71
  %v77 = vcvt.s32.f32 %v72
  %v78 = vcvt.s32.f32 %v73
  %v79 = vcvt.s32.f32 %v74
  %v80 = vadd.f32 %v59, %v75
  %v81 = vadd.f32 %v60, %v76
  %v82 = vadd.f32 %v61, %v77
  %v83 = vadd.f32 %v62, %v78
  %v84 = vadd.f32 %v63, %v79
  %v85 = vperm.slane %v21, 3
  %vm86 = vcmp.eq.s32.totalorder %v16, %v85
  %vm87 = vcmp.eq.s32.totalorder %v17, %v85
  %vm88 = vcmp.eq.s32.totalorder %v18, %v85
  %vm89 = vcmp.eq.s32.totalorder %v19, %v85
  %vm90 = vcmp.eq.s32.totalorder %v20, %v85
  %v91 = vsel %vm86, 1, 0
  %v92 = vsel %vm87, 1, 0
  %v93 = vsel %vm88, 1, 0
  %v94 = vsel %vm89, 1, 0
  %v95 = vsel %vm90, 1, 0
  %v96 = vcvt.s32.f32 %v91
  %v97 = vcvt.s32.f32 %v92
  %v98 = vcvt.s32.f32 %v93
  %v99 = vcvt.s32.f32 %v94
  %v100 = vcvt.s32.f32 %v95
  %v101 = vadd.f32 %v80, %v96
  %v102 = vadd.f32 %v81, %v97
  %v103 = vadd.f32 %v82, %v98
  %v104 = vadd.f32 %v83, %v99
  %v105 = vadd.f32 %v84, %v100
  %v106 = vperm.slane %v21, 4
  %vm107 = vcmp.eq.s32.totalorder %v16, %v106
  %vm108 = vcmp.eq.s32.totalorder %v17, %v106
  %vm109 = vcmp.eq.s32.totalorder %v18, %v106
  %vm110 = vcmp.eq.s32.totalorder %v19, %v106
  %vm111 = vcmp.eq.s32.totalorder %v20, %v106
  %v112 = vsel %vm107, 1, 0
  %v113 = vsel %vm108, 1, 0
  %v114 = vsel %vm109, 1, 0
  %v115 = vsel %vm110, 1, 0
  %v116 = vsel %vm111, 1, 0
  %v117 = vcvt.s32.f32 %v112
  %v118 = vcvt.s32.f32 %v113
  %v119 = vcvt.s32.f32 %v114
  %v120 = vcvt.s32.f32 %v115
  %v121 = vcvt.s32.f32 %v116
  %v122 = vadd.f32 %v101, %v117
  %v123 = vadd.f32 %v102, %v118
  %v124 = vadd.f32 %v103, %v119
  %v125 = vadd.f32 %v104, %v120
  %v126 = vadd.f32 %v105, %v121
  %v127 = vperm.slane %v21, 5
  %vm128 = vcmp.eq.s32.totalorder %v16, %v127
  %vm129 = vcmp.eq.s32.totalorder %v17, %v127
  %vm130 = vcmp.eq.s32.totalorder %v18, %v127
  %vm131 = vcmp.eq.s32.totalorder %v19, %v127
  %vm132 = vcmp.eq.s32.totalorder %v20, %v127
  %v133 = vsel %vm128, 1, 0
  %v134 = vsel %vm129, 1, 0
  %v135 = vsel %vm130, 1, 0
  %v136 = vsel %vm131, 1, 0
  %v137 = vsel %vm132, 1, 0
  %v138 = vcvt.s32.f32 %v133
  %v139 = vcvt.s32.f32 %v134
  %v140 = vcvt.s32.f32 %v135
  %v141 = vcvt.s32.f32 %v136
  %v142 = vcvt.s32.f32 %v137
  %v143 = vadd.f32 %v122, %v138
  %v144 = vadd.f32 %v123, %v139
  %v145 = vadd.f32 %v124, %v140
  %v146 = vadd.f32 %v125, %v141
  %v147 = vadd.f32 %v126, %v142
  %v148 = vperm.slane %v21, 6
  %vm149 = vcmp.eq.s32.totalorder %v16, %v148
  %vm150 = vcmp.eq.s32.totalorder %v17, %v148
  %vm151 = vcmp.eq.s32.totalorder %v18, %v148
  %vm152 = vcmp.eq.s32.totalorder %v19, %v148
  %vm153 = vcmp.eq.s32.totalorder %v20, %v148
  %v154 = vsel %vm149, 1, 0
  %v155 = vsel %vm150, 1, 0
  %v156 = vsel %vm151, 1, 0
  %v157 = vsel %vm152, 1, 0
  %v158 = vsel %vm153, 1, 0
  %v159 = vcvt.s32.f32 %v154
  %v160 = vcvt.s32.f32 %v155
  %v161 = vcvt.s32.f32 %v156
  %v162 = vcvt.s32.f32 %v157
  %v163 = vcvt.s32.f32 %v158
  %v164 = vadd.f32 %v143, %v159
  %v165 = vadd.f32 %v144, %v160
  %v166 = vadd.f32 %v145, %v161
  %v167 = vadd.f32 %v146, %v162
  %v168 = vadd.f32 %v147, %v163
  %v169 = vperm.slane %v21, 7
  %vm170 = vcmp.eq.s32.totalorder %v16, %v169
  %vm171 = vcmp.eq.s32.totalorder %v17, %v169
  %vm172 = vcmp.eq.s32.totalorder %v18, %v169
  %vm173 = vcmp.eq.s32.totalorder %v19, %v169
  %vm174 = vcmp.eq.s32.totalorder %v20, %v169
  %v175 = vsel %vm170, 1, 0
  %v176 = vsel %vm171, 1, 0
  %v177 = vsel %vm172, 1, 0
  %v178 = vsel %vm173, 1, 0
  %v179 = vsel %vm174, 1, 0
  %v180 = vcvt.s32.f32 %v175
  %v181 = vcvt.s32.f32 %v176
  %v182 = vcvt.s32.f32 %v177
  %v183 = vcvt.s32.f32 %v178
  %v184 = vcvt.s32.f32 %v179
  %v185 = vadd.f32 %v164, %v180
  %v186 = vadd.f32 %v165, %v181
  %v187 = vadd.f32 %v166, %v182
  %v188 = vadd.f32 %v167, %v183
  %v189 = vadd.f32 %v168, %v184
  %v190 = vld [vmem:[%s1] sm:$0xff]
  %v191 = vld [vmem:[%s1 + $0x8] sm:$0xff]
  %v192 = vld [vmem:[%s1 + $0x10] sm:$0xff]
  %v193 = vld [vmem:[%s1 + $0x18] sm:$0xff]
  %v194 = vld [vmem:[%s1 + $0x20] sm:$0xff]
  %196 = vset.pattern.permute.xlu0 0
  %197 = vperm.xlu0 %196, %v190
  %v198 = vpop.permute.xlu0 %197
  %201 = vset.pattern.permute.xlu0 0
  %202 = vperm.xlu0 %201, %v191
  %v203 = vpop.permute.xlu0 %202
  %206 = vset.pattern.permute.xlu0 0
  %207 = vperm.xlu0 %206, %v192
  %v208 = vpop.permute.xlu0 %207
  %211 = vset.pattern.permute.xlu0 0
  %212 = vperm.xlu0 %211, %v193
  %v213 = vpop.permute.xlu0 %212
  %216 = vset.pattern.permute.xlu0 0
  %217 = vperm.xlu0 %216, %v194
  %v218 = vpop.permute.xlu0 %217
  %v220 = vmul.f32 %v185, %v198
  %v221 = vmul.f32 %v186, %v203
  %v222 = vmul.f32 %v187, %v208
  %v223 = vmul.f32 %v188, %v213
  %v224 = vmul.f32 %v189, %v218
  %v225 = vadd.f32 %v220, %v221
  %v226 = vadd.f32 %v225, %v222
  %v227 = vadd.f32 %v226, %v223
  %v228 = vadd.f32 %v227, %v224
  %v229 = vrot.slane %v228, 4
  %v230 = vadd.f32 %v228, %v229
  %v231 = vrot.slane %v230, 2
  %v232 = vadd.f32 %v230, %v231
  %v233 = vrot.slane %v232, 1
  %v234 = vadd.f32 %v232, %v233
  %v235 = vmul.f32 %v234, 0.125
  %s236 = sld [smem:[#allocation2]]
  %v237 = vstv %s236
  %v238 = vadd.f32 %v235, %v237
  %239 = vst [vmem:[%s3] sm:$0x1] %v238
  // Predicated region
  $region14: #{directed_evolution_forward.1} parent=0 // pred_check
    _
  $region15: #{directed_evolution_forward.1} parent=0 // pred_check_branch
    %241 = sbr.rel (0) target = $region17
  $region16: #{directed_evolution_forward.1} parent=0 // pred_region
    _
  $region17: #{directed_evolution_forward.1} parent=0 // pred_fallthru
    _
  // Predicated region
  $region18: #{directed_evolution_forward.1} parent=0 // pred_check
    _
  $region19: #{directed_evolution_forward.1} parent=0 // pred_check_branch
    %243 = sbr.rel (0) target = $region21
  $region20: #{directed_evolution_forward.1} parent=0 // pred_region
    _
  $region21: #{directed_evolution_forward.1} parent=0 // pred_fallthru
    _

</llo_original>
